<compile_context>
chip_gen: v6e
topology: v6e:2x2x1
jax: 0.10.0
libtpu: 0.0.40
codegen_flags: <defaults>
</compile_context>

<pallas_src>
import functools
import math

import jax
import jax.numpy as jnp
from jax.experimental import pallas as pl
from jax.experimental.pallas import tpu as pltpu


def _round_up(v, m):
    return (v + m - 1) // m * m


def _conv1d_gelu_kernel(xs_ref, aux_ref, wa_ref, wx_ref, bf_ref, o_ref):
    """One (batch, sequence-tile) grid step.

    xs_ref : (1, rt, 128)       lane-dense input slab tile (G positions / row)
    aux_ref: (1, rt, 2*pad*C)   per-row cross-row halo taps (tiny)
    wa_ref : (128, G*Hp)        block-Toeplitz weight, in-row taps (resident)
    wx_ref : (2*pad*C, G*Hp)    block-Toeplitz weight, cross-row taps (resident)
    bf_ref : (1, G*Hp)          bias tiled G times, f32 (resident)
    o_ref  : (1, rt, G*Hp)      lane-dense output slab tile
    """
    acc = jnp.dot(xs_ref[0], wa_ref[...], preferred_element_type=jnp.float32)
    acc = acc + jnp.dot(aux_ref[0], wx_ref[...],
                        preferred_element_type=jnp.float32)
    acc = acc + bf_ref[...]
    # Exact (erf) GELU, kept in f32 (v5e has no bf16 VPU/EUP).
    inv_sqrt2 = jnp.float32(0.7071067811865476)
    y = 0.5 * acc * (1.0 + jax.lax.erf(acc * inv_sqrt2))
    o_ref[0] = y.astype(o_ref.dtype)


def conv_embedding_pallas(x, weight, bias, *, rt_target=256, use_bf16=False):
    """x: (B, L, C_in); weight: (H, C_in, K) [nn.Conv1d layout]; bias: (H,)."""
    B, L, C_in = x.shape
    H, wc, K = weight.shape
    assert wc == C_in and bias.shape == (H,)
    assert K % 2 == 1, "same-length output requires odd kernel_size"
    pad = K // 2
    out_dtype = x.dtype
    f32 = jnp.float32

    # ---- lane-dense channel geometry --------------------------------------
    # TODO(synk): input_dim > 128 would need a multi-row input packing.
    assert C_in <= 128, "input_dim > 128 not supported by this kernel"
    C = 1
    while C < C_in:
        C *= 2                       # next power of two -> divides 128
    G = 128 // C                     # input positions per 128-lane slab row
    assert pad <= G, "kernel_size too large for this input_dim packing"
    Hp = _round_up(H, C)             # makes G*Hp a multiple of 128
    gh = G * Hp
    aux_w = 2 * pad * C

    # ---- sequence tiling ---------------------------------------------------
    s_raw = pl.cdiv(L, G)            # slab rows actually needed
    rt_target = max(8, int(rt_target))
    if s_raw <= rt_target:
        s_out, rt = s_raw, s_raw                       # single tile
    else:
        s_out = _round_up(s_raw, 8)
        rt = (min(rt_target, s_out) // 8) * 8
        while s_out % rt != 0:                         # largest 8k divisor
            rt -= 8
    n_lt = s_out // rt
    L_main = s_out * G

    # ---- padded weight / bias ---------------------------------------------
    w_t = jnp.transpose(weight, (2, 1, 0)).astype(f32)        # (K, C_in, H)
    w_t = jnp.pad(w_t, ((0, 0), (0, C - C_in), (0, Hp - H)))   # (K, C, Hp)
    x_c = x if C == C_in else jnp.pad(x, ((0, 0), (0, 0), (0, C - C_in)))

    # ---- main lane-dense input slab: xs[b,r,m*C+c] = x[b, r*G+m, c] --------
    if L_main == L:
        xs = x_c.reshape(B, s_out, G * C)        # free row-major reinterpret
    else:
        xs = jnp.pad(x_c, ((0, 0), (0, L_main - L), (0, 0))
                     ).reshape(B, s_out, G * C)

    # ---- per-row halo sliver (cross-row taps only) -------------------------
    # aux[b,r, j*C+c] = x[b, r*G - pad + j, c]      for j <  pad   (left)
    #                 = x[b, (r+1)*G + (j-pad), c]  for j >= pad   (right)
    lpad = jnp.pad(x_c, ((0, 0), (pad, max(0, L_main - L - pad)), (0, 0)))
    left = lpad[:, :L_main, :].reshape(B, s_out, G, C)[:, :, :pad, :]
    rpad = jnp.pad(x_c, ((0, 0), (0, (s_out + 1) * G - L), (0, 0)))
    right = rpad.reshape(B, s_out + 1, G, C)[:, 1:, :pad, :]
    aux = jnp.concatenate([left, right], axis=2).reshape(B, s_out, aux_w)

    # ---- folded block-Toeplitz weights -------------------------------------
    wa = jnp.zeros((G, C, G, Hp), f32)           # in-row taps
    wx = jnp.zeros((2 * pad, C, G, Hp), f32)     # cross-row taps
    for g in range(G):
        for k in range(K):
            d = g + k - pad
            if 0 <= d < G:
                wa = wa.at[d, :, g, :].set(w_t[k])
            elif d < 0:
                wx = wx.at[d + pad, :, g, :].set(w_t[k])
            else:
                wx = wx.at[pad + (d - G), :, g, :].set(w_t[k])
    wa = wa.reshape(G * C, gh)
    wx = wx.reshape(aux_w, gh)
    bf = jnp.tile(jnp.pad(bias.astype(f32), (0, Hp - H)), G).reshape(1, gh)

    cdt = jnp.bfloat16 if use_bf16 else xs.dtype
    xs, aux = xs.astype(cdt), aux.astype(cdt)
    wa, wx = wa.astype(cdt), wx.astype(cdt)

    in_es = jnp.dtype(cdt).itemsize
    out_es = jnp.dtype(out_dtype).itemsize
    blk_bytes = (2 * rt * (128 + aux_w) * in_es          # input blocks (x2 buf)
                 + 2 * rt * gh * out_es                   # output block (x2 buf)
                 + 2 * ((G * C + aux_w) * gh * in_es + gh * 4))  # weights+bias
    vmem_limit = int(min(max(4 * blk_bytes, 16 << 20), 48 << 20))

    out_slab = pl.pallas_call(
        _conv1d_gelu_kernel,
        out_shape=jax.ShapeDtypeStruct((B, s_out, gh), out_dtype),
        grid_spec=pltpu.PrefetchScalarGridSpec(
            num_scalar_prefetch=0,
            grid=(B, n_lt),
            in_specs=[
                pl.BlockSpec((1, rt, G * C), lambda b, t: (b, t, 0)),
                pl.BlockSpec((1, rt, aux_w), lambda b, t: (b, t, 0)),
                pl.BlockSpec((G * C, gh), lambda b, t: (0, 0)),
                pl.BlockSpec((aux_w, gh), lambda b, t: (0, 0)),
                pl.BlockSpec((1, gh), lambda b, t: (0, 0)),
            ],
            out_specs=pl.BlockSpec((1, rt, gh), lambda b, t: (b, t, 0)),
        ),
        compiler_params=pltpu.CompilerParams(
            dimension_semantics=("parallel", "parallel"),
            vmem_limit_bytes=vmem_limit),
        cost_estimate=pl.CostEstimate(
            flops=2 * B * L * K * C_in * H,
            transcendentals=B * L * H,
            bytes_accessed=4 * (B * L * C_in + B * L * H + K * C_in * H + H)),
    )(xs, aux, wa, wx, bf)

    # (B, s_out, G*Hp) -> (B, L_main, Hp): free row-major reinterpretation.
    return out_slab.reshape(B, L_main, Hp)[:, :L, :H]


def _reference_conv_gelu(x, weight, bias, K):
    """Pure-JAX reference mirroring the PyTorch forward (exact GELU)."""
    pad = K // 2
    y = jax.lax.conv_general_dilated(
        jnp.transpose(x, (0, 2, 1)), weight, window_strides=(1,),
        padding=((pad, pad),), dimension_numbers=("NCH", "OIH", "NCH"),
        precision=jax.lax.Precision.HIGHEST)
    y = y + bias[None, :, None]
    y = jax.nn.gelu(y, approximate=False)
    return jnp.transpose(y, (0, 2, 1))


if __name__ == "__main__":
    def _check(key, *, B, L, C_in, H, K, rt_target):
        kx, kw, kb = jax.random.split(key, 3)
        bound = 1.0 / math.sqrt(C_in * K)          # nn.Conv1d default init
        weight = jax.random.uniform(kw, (H, C_in, K), jnp.float32, -bound, bound)
        bias = jax.random.uniform(kb, (H,), jnp.float32, -bound, bound)
        x = jax.random.normal(kx, (B, L, C_in), jnp.float32)
        run = jax.jit(functools.partial(conv_embedding_pallas,
                                        rt_target=rt_target))
        out = jax.block_until_ready(run(x, weight, bias))
        ref = _reference_conv_gelu(x, weight, bias, K)
        assert out.shape == (B, L, H)
        assert jnp.allclose(out, ref, atol=1e-4, rtol=1e-4), \
            float(jnp.max(jnp.abs(out - ref)))

    key = jax.random.PRNGKey(0)
    k1, k2 = jax.random.split(key)
    # Module defaults (input_dim=8, hidden_dim=32, kernel_size=3).  Small
    # rt_target so the tiny demo exercises several sequence tiles; the
    # cross-tile conv taps come from the precomputed aux halo array.
    _check(k1, B=2, L=256, C_in=8, H=32, K=3, rt_target=8)
    # Ragged shapes: channel / hidden / length zero-padding paths and K=5.
    _check(k2, B=1, L=100, C_in=5, H=20, K=5, rt_target=256)
    print("KERNEL_OK")
</pallas_src>

<mosaic_0001>
module attributes {stable_mosaic.version = 11 : i64} {
  func.func @_conv1d_gelu_kernel(%arg0: i32, %arg1: i32, %arg2: memref<1x8x128xf32, #tpu.memory_space<vmem>>, %arg3: memref<1x8x16xf32, #tpu.memory_space<vmem>>, %arg4: memref<128x512xf32, #tpu.memory_space<vmem>>, %arg5: memref<16x512xf32, #tpu.memory_space<vmem>>, %arg6: memref<1x512xf32, #tpu.memory_space<vmem>>, %arg7: memref<1x8x512xf32, #tpu.memory_space<vmem>>) attributes {dimension_semantics = [#tpu.dimension_semantics<parallel>, #tpu.dimension_semantics<parallel>], iteration_bounds = array<i64: 2, 2>, scalar_prefetch = 0 : i64, scratch_operands = 0 : i64, tpu.core_type = #tpu.core_type<tc>, window_params = [{transform_indices = @transform_0, window_bounds = array<i64: 1, 8, 128>}, {transform_indices = @transform_1, window_bounds = array<i64: 1, 8, 16>}, {pipeline_mode = #tpu.pipeline_mode<synchronous>, transform_indices = @transform_2, window_bounds = array<i64: 128, 512>}, {pipeline_mode = #tpu.pipeline_mode<synchronous>, transform_indices = @transform_3, window_bounds = array<i64: 16, 512>}, {pipeline_mode = #tpu.pipeline_mode<synchronous>, transform_indices = @transform_4, window_bounds = array<i64: 1, 512>}, {transform_indices = @transform_5, window_bounds = array<i64: 1, 8, 512>}]} {
    %c0 = arith.constant 0 : index
    %c0_0 = arith.constant 0 : index
    %c0_1 = arith.constant 0 : index
    %0 = vector.load %arg2[%c0, %c0_0, %c0_1] : memref<1x8x128xf32, #tpu.memory_space<vmem>>, vector<1x8x128xf32>
    %1 = vector.shape_cast %0 : vector<1x8x128xf32> to vector<8x128xf32>
    %c0_2 = arith.constant 0 : index
    %c0_3 = arith.constant 0 : index
    %2 = vector.load %arg4[%c0_2, %c0_3] : memref<128x512xf32, #tpu.memory_space<vmem>>, vector<128x512xf32>
    %cst = arith.constant dense<0.000000e+00> : vector<8x512xf32>
    %3 = tpu.matmul %1, %2, %cst {dimension_numbers = #tpu.dot_dimension_numbers<[1], [0], [0], [1], [0, 0, 1, 1], [], []>} : vector<8x128xf32>, vector<128x512xf32>, vector<8x512xf32> -> vector<8x512xf32>
    %c0_4 = arith.constant 0 : index
    %c0_5 = arith.constant 0 : index
    %c0_6 = arith.constant 0 : index
    %4 = vector.load %arg3[%c0_4, %c0_5, %c0_6] : memref<1x8x16xf32, #tpu.memory_space<vmem>>, vector<1x8x16xf32>
    %5 = vector.shape_cast %4 : vector<1x8x16xf32> to vector<8x16xf32>
    %c0_7 = arith.constant 0 : index
    %c0_8 = arith.constant 0 : index
    %6 = vector.load %arg5[%c0_7, %c0_8] : memref<16x512xf32, #tpu.memory_space<vmem>>, vector<16x512xf32>
    %cst_9 = arith.constant dense<0.000000e+00> : vector<8x512xf32>
    %7 = tpu.matmul %5, %6, %cst_9 {dimension_numbers = #tpu.dot_dimension_numbers<[1], [0], [0], [1], [0, 0, 1, 1], [], []>} : vector<8x16xf32>, vector<16x512xf32>, vector<8x512xf32> -> vector<8x512xf32>
    %8 = arith.addf %3, %7 : vector<8x512xf32>
    %c0_10 = arith.constant 0 : index
    %c0_11 = arith.constant 0 : index
    %9 = vector.load %arg6[%c0_10, %c0_11] : memref<1x512xf32, #tpu.memory_space<vmem>>, vector<1x512xf32>
    %10 = vector.broadcast %9 : vector<1x512xf32> to vector<8x512xf32>
    %11 = arith.addf %8, %10 : vector<8x512xf32>
    %cst_12 = arith.constant 5.000000e-01 : f32
    %12 = vector.broadcast %cst_12 : f32 to vector<8x512xf32>
    %13 = arith.mulf %12, %11 : vector<8x512xf32>
    %cst_13 = arith.constant 0.707106769 : f32
    %14 = vector.broadcast %cst_13 : f32 to vector<8x512xf32>
    %15 = arith.mulf %11, %14 : vector<8x512xf32>
    %16 = math.erf %15 : vector<8x512xf32>
    %cst_14 = arith.constant 1.000000e+00 : f32
    %17 = vector.broadcast %cst_14 : f32 to vector<8x512xf32>
    %18 = arith.addf %17, %16 : vector<8x512xf32>
    %19 = arith.mulf %13, %18 : vector<8x512xf32>
    %c0_15 = arith.constant 0 : index
    %c0_16 = arith.constant 0 : index
    %c0_17 = arith.constant 0 : index
    %20 = vector.load %arg7[%c0_15, %c0_16, %c0_17] : memref<1x8x512xf32, #tpu.memory_space<vmem>>, vector<1x8x512xf32>
    %21 = vector.shape_cast %20 : vector<1x8x512xf32> to vector<8x512xf32>
    %22 = vector.shape_cast %19 : vector<8x512xf32> to vector<1x8x512xf32>
    tpu.vector_store %arg7[%c0_15, %c0_16, %c0_17], %22 {strides = array<i32>} : memref<1x8x512xf32, #tpu.memory_space<vmem>>, vector<1x8x512xf32>,
    return
  }
  func.func @transform_0(%arg0: i32, %arg1: i32) -> (i32, i32, i32) {
    %c0_i32 = arith.constant 0 : i32
    %c0_i32_0 = arith.constant 0 : i32
    return %arg0, %arg1, %c0_i32 : i32, i32, i32
  }
  func.func @transform_1(%arg0: i32, %arg1: i32) -> (i32, i32, i32) {
    %c0_i32 = arith.constant 0 : i32
    %c0_i32_0 = arith.constant 0 : i32
    return %arg0, %arg1, %c0_i32 : i32, i32, i32
  }
  func.func @transform_2(%arg0: i32, %arg1: i32) -> (i32, i32) {
    %c0_i32 = arith.constant 0 : i32
    %c0_i32_0 = arith.constant 0 : i32
    %c0_i32_1 = arith.constant 0 : i32
    return %c0_i32, %c0_i32_0 : i32, i32
  }
  func.func @transform_3(%arg0: i32, %arg1: i32) -> (i32, i32) {
    %c0_i32 = arith.constant 0 : i32
    %c0_i32_0 = arith.constant 0 : i32
    %c0_i32_1 = arith.constant 0 : i32
    return %c0_i32, %c0_i32_0 : i32, i32
  }
  func.func @transform_4(%arg0: i32, %arg1: i32) -> (i32, i32) {
    %c0_i32 = arith.constant 0 : i32
    %c0_i32_0 = arith.constant 0 : i32
    %c0_i32_1 = arith.constant 0 : i32
    return %c0_i32, %c0_i32_0 : i32, i32
  }
  func.func @transform_5(%arg0: i32, %arg1: i32) -> (i32, i32, i32) {
    %c0_i32 = arith.constant 0 : i32
    %c0_i32_0 = arith.constant 0 : i32
    return %arg0, %arg1, %c0_i32 : i32, i32, i32
  }
}

</mosaic_0001>

<llo_original>
// kernel: tile.8
$region0: #{tile.8}
  #allocation0 [shape = 's32[1]{0}', space=sflag, size = 0x4, scoped, tag = 'scoped memory for tile.8']
  %s0 = inlined_call_operand.vmem [shape: f32[32], index: 0, kind: input, shape index: {}]
  %s1 = inlined_call_operand.vmem [shape: f32[16,32], index: 1, kind: output, shape index: {}]
  // Predicated region
  $region2: #{tile.8} parent=0 // pred_check
    _
  $region3: #{tile.8} parent=0 // pred_check_branch
    %3 = sbr.rel (0) target = $region5
  $region4: #{tile.8} parent=0 // pred_region
    _
  $region5: #{tile.8} parent=0 // pred_fallthru
    _
  %v4 = vld [vmem:[%s0] ss:$0 sm:$0xff]
  %5 = vst [vmem:[%s1] sm:$0xff] %v4
  %s6 = scalar_lea.vmem %s1, 8
  %7 = vst [vmem:[%s6] sm:$0xff] %v4

// kernel: tile.9
$region0: #{tile.9}
  %s0 = inlined_call_operand.vmem [shape: f32[16,32], index: 0, kind: input, shape index: {}]
  %s1 = inlined_call_operand.vmem [shape: f32[1,512], index: 1, kind: output, shape index: {}]
  $region1: #{tile.9} parent=0
    #allocation0 [shape = 'u8[16384]{0}', space=vmem, size = 0x4000, scoped, tag = 'scoped mem for output reshape']
    %v2 = vld [vmem:[%s0] ss:$4 sm:$0xf]
    %vm3 = vcmask 261120
    %4 = vst.msk [vmem:[#allocation0] ss:$8 sm:$0xf] %vm3, %v2
    %s5 = scalar_lea.vmem %s0, 3
    %v6 = vld [vmem:[%s5] ss:$4 sm:$0xf]
    %7 = vrot.lane.b32.xlu0 %v6, 96
    %v8 = vpop.permute.xlu0 %7
    %vm9 = vcmask 1048320
    %10 = vst.msk [vmem:[#allocation0] ss:$8 sm:$0xf] %vm9, %v8
    %s11 = scalar_lea.vmem %s0, 2
    %v12 = vld [vmem:[%s11] ss:$4 sm:$0xf]
    %13 = vrot.lane.b32.xlu0 %v12, 64
    %v14 = vpop.permute.xlu0 %13
    %vm15 = vcmask 785920
    %16 = vst.msk [vmem:[#allocation0] ss:$8 sm:$0xf] %vm15, %v14
    %s17 = scalar_lea.vmem %s0, 1
    %v18 = vld [vmem:[%s17] ss:$4 sm:$0xf]
    %19 = vrot.lane.b32.xlu0 %v18, 32
    %v20 = vpop.permute.xlu0 %19
    %vm21 = vcmask 523520
    %22 = vst.msk [vmem:[#allocation0] ss:$8 sm:$0xf] %vm21, %v20
    %s24 = sshll.u32 1, 1
    %s25 = ssub.s32 %s24, 1
    %v27 = vld [vmem:[#allocation0] sm:%s25]
    %s28 = sshll.u32 1, 1
    %s29 = ssub.s32 %s28, 1
    %30 = vst [vmem:[%s1] sm:%s29] %v27
    %s31 = scalar_lea.vmem [#allocation0], 8
    %v32 = vld [vmem:[%s31] sm:%s25]
    %s33 = sshll.u32 1, 1
    %s34 = ssub.s32 %s33, 1
    %s35 = scalar_lea.vmem %s1, 1
    %36 = vst [vmem:[%s35] sm:%s34] %v32
    %s37 = scalar_lea.vmem [#allocation0], 16
    %v38 = vld [vmem:[%s37] sm:%s25]
    %s39 = sshll.u32 1, 1
    %s40 = ssub.s32 %s39, 1
    %s41 = smul.addr 1, 2
    %s42 = scalar_lea.vmem %s1, %s41
    %43 = vst [vmem:[%s42] sm:%s40] %v38
    %s44 = scalar_lea.vmem [#allocation0], 24
    %v45 = vld [vmem:[%s44] sm:%s25]
    %s46 = sshll.u32 1, 1
    %s47 = ssub.s32 %s46, 1
    %s48 = smul.addr 1, 3
    %s49 = scalar_lea.vmem %s1, %s48
    %50 = vst [vmem:[%s49] sm:%s47] %v45

// kernel: conv_embedding_pallas.1
$region0: #{conv_embedding_pallas.1}
  #allocation0 [shape = 'u32[]', space=smem, size = 0x4, offset = 0x4, fixed_abs, tag = 'smem constant byte address 0x4 - core index']
  #allocation1 [shape = 'u32[144,128]{1,0:T(1,128)}', space=vmem, size = 0x12000, scoped, tag = 'internal scratch']
  %s0 = inlined_call_operand.vmem [shape: f32[2,16,128], index: 0, kind: input, shape index: {}]
  %s1 = inlined_call_operand.vmem [shape: f32[2,16,16], index: 1, kind: input, shape index: {}]
  %s2 = inlined_call_operand.vmem [shape: f32[128,512], index: 2, kind: input, shape index: {}]
  %s3 = inlined_call_operand.vmem [shape: f32[16,512], index: 3, kind: input, shape index: {}]
  %s4 = inlined_call_operand.vmem [shape: f32[1,512], index: 4, kind: input, shape index: {}]
  %s5 = inlined_call_operand.vmem [shape: f32[2,16,512], index: 5, kind: output, shape index: {}]
  %s6 = sld [smem:[#allocation0]]
  $region53: #{conv_embedding_pallas.1} parent=0
    _
  %s8 = ssub.s32 1, %s6
  %s9 = scalar_select 0, %s8, %s6
  loop: start=0, step=1, limit=6
  $region2: #{conv_embedding_pallas.1} parent=0 // loop_pre_header
    _
  $region3: #{conv_embedding_pallas.1} parent=0 // loop_header
    %s11 = sphi 0, %s15
    %p12 = scmp.ge.s32.totalorder %s11, 6
    %s18 = sphi 0, %s30
    %s19 = sphi 0, %s26
    %s20 = sphi 0, %s18
    %s21 = sphi 0, %s19
    %s22 = sphi 0, %s20
    %s23 = sphi 0, %s21
    %s35 = sphi 0, %s37
    %s38 = sphi 0, %s35
    %s39 = sphi 0, %s38
    %s55 = sphi 0, %s39
    %s63 = sphi 0, %s65
    %s66 = sphi 0, %s63
    %s67 = sphi 0, %s66
    %s83 = sphi 0, %s67
    %s87 = sphi 0, %s87
    %s89 = sphi 0, %s87
    %s90 = sphi 0, %s89
    %s104 = sphi 0, %s90
    %s108 = sphi 0, %s108
    %s110 = sphi 0, %s108
    %s111 = sphi 0, %s110
    %s125 = sphi 0, %s111
    %s129 = sphi 0, %s129
    %s131 = sphi 0, %s129
    %s132 = sphi 0, %s131
    %s146 = sphi 0, %s132
    %s154 = sphi 0, %s156
    %s157 = sphi 0, %s154
    %s158 = sphi 0, %s157
    %s174 = sphi 0, %s158
  $region4: #{conv_embedding_pallas.1} parent=0 // loop_header_branch
    %14 = sbr.rel (%p12) target = $region8
  $region5: #{conv_embedding_pallas.1} parent=0 // loop_body
    %s16 = ssub.s32 %s11, 1
    %s17 = ssub.s32 %s11, 2
    %s24 = sadd.s32 1, %s19
    %p25 = scmp.ge.s32.totalorder %s24, 2
    %s26 = scalar_select %p25, 0, %s24
    %s27 = sadd.s32 1, %s18
    %s28 = scalar_select %p25, %s27, %s18
    %p29 = scmp.ge.s32.totalorder %s28, 2
    %s30 = scalar_select %p29, 0, %s28
    %s31 = ssub.s32 %s18, %s30
    %s32 = ssub.s32 %s19, %s26
    %s33 = sor.u32 %s31, %s32
    %p34 = scmp.eq.s32.totalorder %s33, 0
    %s36 = sadd.s32 %s35, 1
    %s37 = scalar_select %p34, %s35, %s36
    %p40 = pneg %p34
    %p41 = scmp.eq.s32.totalorder %s11, 3
    %p42 = por %p40, %p41
    %p43 = scmp.ne.s32.totalorder %s35, %s38
    %p44 = scmp.eq.s32.totalorder %s11, 0
    %p45 = por %p43, %p44
    %p46 = scmp.ne.s32.totalorder %s35, %s38
    %p47 = scmp.eq.s32.totalorder %s16, 3
    %p48 = por %p46, %p47
    %p49 = scmp.ne.s32.totalorder %s38, %s39
    %p50 = scmp.eq.s32.totalorder %s16, 0
    %p51 = por %p49, %p50
    %p52 = scmp.ne.s32.totalorder %s38, %s39
    %p53 = scmp.eq.s32.totalorder %s17, 3
    %p54 = por %p52, %p53
    %p56 = scmp.ne.s32.totalorder %s39, %s55
    %p57 = scmp.eq.s32.totalorder %s17, 0
    %p58 = por %p56, %p57
    %s59 = ssub.s32 %s18, %s30
    %s60 = ssub.s32 %s19, %s26
    %s61 = sor.u32 %s59, %s60
    %p62 = scmp.eq.s32.totalorder %s61, 0
    %s64 = sadd.s32 %s63, 1
    %s65 = scalar_select %p62, %s63, %s64
    %p68 = pneg %p62
    %p69 = scmp.eq.s32.totalorder %s11, 3
    %p70 = por %p68, %p69
    %p71 = scmp.ne.s32.totalorder %s63, %s66
    %p72 = scmp.eq.s32.totalorder %s11, 0
    %p73 = por %p71, %p72
    %p74 = scmp.ne.s32.totalorder %s63, %s66
    %p75 = scmp.eq.s32.totalorder %s16, 3
    %p76 = por %p74, %p75
    %p77 = scmp.ne.s32.totalorder %s66, %s67
    %p78 = scmp.eq.s32.totalorder %s16, 0
    %p79 = por %p77, %p78
    %p80 = scmp.ne.s32.totalorder %s66, %s67
    %p81 = scmp.eq.s32.totalorder %s17, 3
    %p82 = por %p80, %p81
    %p84 = scmp.ne.s32.totalorder %s67, %s83
    %p85 = scmp.eq.s32.totalorder %s17, 0
    %p86 = por %p84, %p85
    %s88 = sadd.s32 %s87, 1
    %p91 = scmp.eq.s32.totalorder %s11, 3
    %p92 = scmp.ne.s32.totalorder %s87, %s89
    %p93 = scmp.eq.s32.totalorder %s11, 0
    %p94 = por %p92, %p93
    %p95 = scmp.ne.s32.totalorder %s87, %s89
    %p96 = scmp.eq.s32.totalorder %s16, 3
    %p97 = por %p95, %p96
    %p98 = scmp.ne.s32.totalorder %s89, %s90
    %p99 = scmp.eq.s32.totalorder %s16, 0
    %p100 = por %p98, %p99
    %p101 = scmp.ne.s32.totalorder %s89, %s90
    %p102 = scmp.eq.s32.totalorder %s17, 3
    %p103 = por %p101, %p102
    %p105 = scmp.ne.s32.totalorder %s90, %s104
    %p106 = scmp.eq.s32.totalorder %s17, 0
    %p107 = por %p105, %p106
    %s109 = sadd.s32 %s108, 1
    %p112 = scmp.eq.s32.totalorder %s11, 3
    %p113 = scmp.ne.s32.totalorder %s108, %s110
    %p114 = scmp.eq.s32.totalorder %s11, 0
    %p115 = por %p113, %p114
    %p116 = scmp.ne.s32.totalorder %s108, %s110
    %p117 = scmp.eq.s32.totalorder %s16, 3
    %p118 = por %p116, %p117
    %p119 = scmp.ne.s32.totalorder %s110, %s111
    %p120 = scmp.eq.s32.totalorder %s16, 0
    %p121 = por %p119, %p120
    %p122 = scmp.ne.s32.totalorder %s110, %s111
    %p123 = scmp.eq.s32.totalorder %s17, 3
    %p124 = por %p122, %p123
    %p126 = scmp.ne.s32.totalorder %s111, %s125
    %p127 = scmp.eq.s32.totalorder %s17, 0
    %p128 = por %p126, %p127
    %s130 = sadd.s32 %s129, 1
    %p133 = scmp.eq.s32.totalorder %s11, 3
    %p134 = scmp.ne.s32.totalorder %s129, %s131
    %p135 = scmp.eq.s32.totalorder %s11, 0
    %p136 = por %p134, %p135
    %p137 = scmp.ne.s32.totalorder %s129, %s131
    %p138 = scmp.eq.s32.totalorder %s16, 3
    %p139 = por %p137, %p138
    %p140 = scmp.ne.s32.totalorder %s131, %s132
    %p141 = scmp.eq.s32.totalorder %s16, 0
    %p142 = por %p140, %p141
    %p143 = scmp.ne.s32.totalorder %s131, %s132
    %p144 = scmp.eq.s32.totalorder %s17, 3
    %p145 = por %p143, %p144
    %p147 = scmp.ne.s32.totalorder %s132, %s146
    %p148 = scmp.eq.s32.totalorder %s17, 0
    %p149 = por %p147, %p148
    %s150 = ssub.s32 %s18, %s30
    %s151 = ssub.s32 %s19, %s26
    %s152 = sor.u32 %s150, %s151
    %p153 = scmp.eq.s32.totalorder %s152, 0
    %s155 = sadd.s32 %s154, 1
    %s156 = scalar_select %p153, %s154, %s155
    %p159 = pneg %p153
    %p160 = scmp.eq.s32.totalorder %s11, 3
    %p161 = por %p159, %p160
    %p162 = scmp.ne.s32.totalorder %s154, %s157
    %p163 = scmp.eq.s32.totalorder %s11, 0
    %p164 = por %p162, %p163
    %p165 = scmp.ne.s32.totalorder %s154, %s157
    %p166 = scmp.eq.s32.totalorder %s16, 3
    %p167 = por %p165, %p166
    %p168 = scmp.ne.s32.totalorder %s157, %s158
    %p169 = scmp.eq.s32.totalorder %s16, 0
    %p170 = por %p168, %p169
    %p171 = scmp.ne.s32.totalorder %s157, %s158
    %p172 = scmp.eq.s32.totalorder %s17, 3
    %p173 = por %p171, %p172
    %p175 = scmp.ne.s32.totalorder %s158, %s174
    %p176 = scmp.eq.s32.totalorder %s17, 0
    %p177 = por %p175, %p176
    %p178 = scmp.le.s32.totalorder 1, %s11
    %p179 = scmp.lt.s32.totalorder %s11, 5
    %p180 = pnand %p178, %p179
    %p181 = pneg %p180
    // Predicated region
    $region9: #{conv_embedding_pallas.1} parent=5 // pred_check
      _
    $region10: #{conv_embedding_pallas.1} parent=5 // pred_check_branch
      %183 = sbr.rel (%p180) target = $region12
    $region11: #{conv_embedding_pallas.1} parent=5 // pred_region
      %s184 = ssub.s32 %s11, 1
      // Predicated region
      $region13: #{conv_embedding_pallas.1} parent=11 // pred_check
        %p185 = pneg %p100
      $region14: #{conv_embedding_pallas.1} parent=11 // pred_check_branch
        %187 = sbr.rel (%p185) target = $region16
      $region15: #{conv_embedding_pallas.1} parent=11 // pred_region
        _
      $region16: #{conv_embedding_pallas.1} parent=11 // pred_fallthru
        _
      // Predicated region
      $region17: #{conv_embedding_pallas.1} parent=11 // pred_check
        %p188 = pneg %p121
      $region18: #{conv_embedding_pallas.1} parent=11 // pred_check_branch
        %190 = sbr.rel (%p188) target = $region20
      $region19: #{conv_embedding_pallas.1} parent=11 // pred_region
        _
      $region20: #{conv_embedding_pallas.1} parent=11 // pred_fallthru
        _
      // Predicated region
      $region21: #{conv_embedding_pallas.1} parent=11 // pred_check
        %p191 = pneg %p142
      $region22: #{conv_embedding_pallas.1} parent=11 // pred_check_branch
        %193 = sbr.rel (%p191) target = $region24
      $region23: #{conv_embedding_pallas.1} parent=11 // pred_region
        _
      $region24: #{conv_embedding_pallas.1} parent=11 // pred_fallthru
        _
    $region12: #{conv_embedding_pallas.1} parent=5 // pred_fallthru
      _
    %p194 = scmp.lt.s32.totalorder %s11, 4
    // Predicated region
    $region25: #{conv_embedding_pallas.1} parent=5 // pred_check
      %p195 = pneg %p194
    $region26: #{conv_embedding_pallas.1} parent=5 // pred_check_branch
      %197 = sbr.rel (%p195) target = $region28
    $region27: #{conv_embedding_pallas.1} parent=5 // pred_region
      // Predicated region
      $region29: #{conv_embedding_pallas.1} parent=27 // pred_check
        %p198 = pneg %p45
      $region30: #{conv_embedding_pallas.1} parent=27 // pred_check_branch
        %200 = sbr.rel (%p198) target = $region32
      $region31: #{conv_embedding_pallas.1} parent=27 // pred_region
        %p201 = scmp.lt.s32.totalorder %s18, 1
        %s202 = scalar_select %p201, %s18, 1
        %p203 = scmp.lt.s32.totalorder %s19, 1
        %s204 = scalar_select %p203, %s19, 1
        %s205 = smul.addr %s202, 2
        %s206 = sadd.s32 %s204, %s205
        %s207 = smul.addr %s206, 8
        %s208 = scalar_lea.vmem %s0, %s207
      $region32: #{conv_embedding_pallas.1} parent=27 // pred_fallthru
        _
      // Predicated region
      $region33: #{conv_embedding_pallas.1} parent=27 // pred_check
        %p209 = pneg %p73
      $region34: #{conv_embedding_pallas.1} parent=27 // pred_check_branch
        %211 = sbr.rel (%p209) target = $region36
      $region35: #{conv_embedding_pallas.1} parent=27 // pred_region
        %p212 = scmp.lt.s32.totalorder %s18, 1
        %s213 = scalar_select %p212, %s18, 1
        %p214 = scmp.lt.s32.totalorder %s19, 1
        %s215 = scalar_select %p214, %s19, 1
        %s216 = smul.addr %s213, 2
        %s217 = sadd.s32 %s215, %s216
        %s218 = smul.addr %s217, 8
        %s219 = scalar_lea.vmem %s1, %s218
      $region36: #{conv_embedding_pallas.1} parent=27 // pred_fallthru
        _
    $region28: #{conv_embedding_pallas.1} parent=5 // pred_fallthru
      _
    %p220 = scmp.le.s32.totalorder 1, %s11
    %p221 = scmp.lt.s32.totalorder %s11, 5
    %p222 = pnand %p220, %p221
    %p223 = pneg %p222
    // Predicated region
    $region37: #{conv_embedding_pallas.1} parent=5 // pred_check
      _
    $region38: #{conv_embedding_pallas.1} parent=5 // pred_check_branch
      %225 = sbr.rel (%p222) target = $region40
    $region39: #{conv_embedding_pallas.1} parent=5 // pred_region
      %s226 = ssub.s32 %s11, 1
      %p227 = scmp.lt.s32.totalorder %s20, 1
      %s228 = scalar_select %p227, %s20, 1
      %p229 = scmp.lt.s32.totalorder %s21, 1
      %s230 = scalar_select %p229, %s21, 1
      %s231 = smul.addr %s228, 2
      %s232 = sadd.s32 %s230, %s231
      %s233 = smul.addr %s232, 8
      %s234 = scalar_lea.vmem %s0, %s233
      %p235 = pneg %p51
      %p236 = pneg %p48
      %p237 = scmp.lt.s32.totalorder %s20, 1
      %s238 = scalar_select %p237, %s20, 1
      %p239 = scmp.lt.s32.totalorder %s21, 1
      %s240 = scalar_select %p239, %s21, 1
      %s241 = smul.addr %s238, 2
      %s242 = sadd.s32 %s240, %s241
      %s243 = smul.addr %s242, 8
      %s244 = scalar_lea.vmem %s1, %s243
      %p245 = pneg %p79
      %p246 = pneg %p76
      %p247 = pneg %p100
      %p248 = pneg %p97
      %p249 = pneg %p121
      %p250 = pneg %p118
      %p251 = pneg %p142
      %p252 = pneg %p139
      %p253 = pneg %p170
      %p254 = pneg %p167
      %p255 = scmp.lt.s32.totalorder %s20, 1
      %s256 = scalar_select %p255, %s20, 1
      %p257 = scmp.lt.s32.totalorder %s21, 1
      %s258 = scalar_select %p257, %s21, 1
      %s259 = smul.addr %s258, 4
      %s260 = smul.addr %s256, 8
      %s261 = sadd.s32 %s259, %s260
      %s262 = smul.addr %s261, 8
      %s263 = scalar_lea.vmem %s5, %s262
      %p264 = scmp.lt.s32.totalorder %s20, 1
      %s265 = scalar_select %p264, %s20, 1
      %p266 = scmp.lt.s32.totalorder %s21, 1
      %s267 = scalar_select %p266, %s21, 1
      %s268 = smul.addr %s265, 2
      %s269 = sadd.s32 %s267, %s268
      %s270 = smul.addr %s269, 8
      %s271 = scalar_lea.vmem %s0, %s270
      %p272 = scmp.lt.s32.totalorder %s20, 1
      %s273 = scalar_select %p272, %s20, 1
      %p274 = scmp.lt.s32.totalorder %s21, 1
      %s275 = scalar_select %p274, %s21, 1
      %s276 = smul.addr %s273, 2
      %s277 = sadd.s32 %s275, %s276
      %s278 = smul.addr %s277, 8
      %s279 = scalar_lea.vmem %s1, %s278
      %p280 = scmp.lt.s32.totalorder %s20, 1
      %s281 = scalar_select %p280, %s20, 1
      %p282 = scmp.lt.s32.totalorder %s21, 1
      %s283 = scalar_select %p282, %s21, 1
      %s284 = smul.addr %s283, 4
      %s285 = smul.addr %s281, 8
      %s286 = sadd.s32 %s284, %s285
      %s287 = smul.addr %s286, 8
      %s288 = scalar_lea.vmem %s5, %s287
      %v289 = vld [vmem:[%s271] sm:$0xff]
      %v290 = vld [vmem:[%s2] sm:$0xff]
      %v291 = vld [vmem:[%s2 + $0x8] sm:$0xff]
      %v292 = vld [vmem:[%s2 + $0x10] sm:$0xff]
      %v293 = vld [vmem:[%s2 + $0x18] sm:$0xff]
      %v294 = vld [vmem:[%s2 + $0x20] sm:$0xff]
      %v295 = vld [vmem:[%s2 + $0x28] sm:$0xff]
      %v296 = vld [vmem:[%s2 + $0x30] sm:$0xff]
      %v297 = vld [vmem:[%s2 + $0x38] sm:$0xff]
      %v298 = vld [vmem:[%s2 + $0x40] sm:$0xff]
      %v299 = vld [vmem:[%s2 + $0x48] sm:$0xff]
      %v300 = vld [vmem:[%s2 + $0x50] sm:$0xff]
      %v301 = vld [vmem:[%s2 + $0x58] sm:$0xff]
      %v302 = vld [vmem:[%s2 + $0x60] sm:$0xff]
      %v303 = vld [vmem:[%s2 + $0x68] sm:$0xff]
      %v304 = vld [vmem:[%s2 + $0x70] sm:$0xff]
      %v305 = vld [vmem:[%s2 + $0x78] sm:$0xff]
      %v306 = vld [vmem:[%s2 + $0x80] sm:$0xff]
      %v307 = vld [vmem:[%s2 + $0x88] sm:$0xff]
      %v308 = vld [vmem:[%s2 + $0x90] sm:$0xff]
      %v309 = vld [vmem:[%s2 + $0x98] sm:$0xff]
      %v310 = vld [vmem:[%s2 + $0xa0] sm:$0xff]
      %v311 = vld [vmem:[%s2 + $0xa8] sm:$0xff]
      %v312 = vld [vmem:[%s2 + $0xb0] sm:$0xff]
      %v313 = vld [vmem:[%s2 + $0xb8] sm:$0xff]
      %v314 = vld [vmem:[%s2 + $0xc0] sm:$0xff]
      %v315 = vld [vmem:[%s2 + $0xc8] sm:$0xff]
      %v316 = vld [vmem:[%s2 + $0xd0] sm:$0xff]
      %v317 = vld [vmem:[%s2 + $0xd8] sm:$0xff]
      %v318 = vld [vmem:[%s2 + $0xe0] sm:$0xff]
      %v319 = vld [vmem:[%s2 + $0xe8] sm:$0xff]
      %v320 = vld [vmem:[%s2 + $0xf0] sm:$0xff]
      %v321 = vld [vmem:[%s2 + $0xf8] sm:$0xff]
      %v322 = vld [vmem:[%s2 + $0x100] sm:$0xff]
      %v323 = vld [vmem:[%s2 + $0x108] sm:$0xff]
      %v324 = vld [vmem:[%s2 + $0x110] sm:$0xff]
      %v325 = vld [vmem:[%s2 + $0x118] sm:$0xff]
      %v326 = vld [vmem:[%s2 + $0x120] sm:$0xff]
      %v327 = vld [vmem:[%s2 + $0x128] sm:$0xff]
      %v328 = vld [vmem:[%s2 + $0x130] sm:$0xff]
      %v329 = vld [vmem:[%s2 + $0x138] sm:$0xff]
      %v330 = vld [vmem:[%s2 + $0x140] sm:$0xff]
      %v331 = vld [vmem:[%s2 + $0x148] sm:$0xff]
      %v332 = vld [vmem:[%s2 + $0x150] sm:$0xff]
      %v333 = vld [vmem:[%s2 + $0x158] sm:$0xff]
      %v334 = vld [vmem:[%s2 + $0x160] sm:$0xff]
      %v335 = vld [vmem:[%s2 + $0x168] sm:$0xff]
      %v336 = vld [vmem:[%s2 + $0x170] sm:$0xff]
      %v337 = vld [vmem:[%s2 + $0x178] sm:$0xff]
      %v338 = vld [vmem:[%s2 + $0x180] sm:$0xff]
      %v339 = vld [vmem:[%s2 + $0x188] sm:$0xff]
      %v340 = vld [vmem:[%s2 + $0x190] sm:$0xff]
      %v341 = vld [vmem:[%s2 + $0x198] sm:$0xff]
      %v342 = vld [vmem:[%s2 + $0x1a0] sm:$0xff]
      %v343 = vld [vmem:[%s2 + $0x1a8] sm:$0xff]
      %v344 = vld [vmem:[%s2 + $0x1b0] sm:$0xff]
      %v345 = vld [vmem:[%s2 + $0x1b8] sm:$0xff]
      %v346 = vld [vmem:[%s2 + $0x1c0] sm:$0xff]
      %v347 = vld [vmem:[%s2 + $0x1c8] sm:$0xff]
      %v348 = vld [vmem:[%s2 + $0x1d0] sm:$0xff]
      %v349 = vld [vmem:[%s2 + $0x1d8] sm:$0xff]
      %v350 = vld [vmem:[%s2 + $0x1e0] sm:$0xff]
      %v351 = vld [vmem:[%s2 + $0x1e8] sm:$0xff]
      %v352 = vld [vmem:[%s2 + $0x1f0] sm:$0xff]
      %v353 = vld [vmem:[%s2 + $0x1f8] sm:$0xff]
      %v354 = vld [vmem:[%s279] sm:$0xff]
      %v355 = vld [vmem:[%s3] sm:$0xff]
      %v356 = vld [vmem:[%s3 + $0x8] sm:$0xff]
      %v357 = vld [vmem:[%s3 + $0x10] sm:$0xff]
      %v358 = vld [vmem:[%s3 + $0x18] sm:$0xff]
      %v359 = vld [vmem:[%s3 + $0x20] sm:$0xff]
      %v360 = vld [vmem:[%s3 + $0x28] sm:$0xff]
      %v361 = vld [vmem:[%s3 + $0x30] sm:$0xff]
      %v362 = vld [vmem:[%s3 + $0x38] sm:$0xff]
      %vm363 = vcmask 130048
      %v365 = vsel %vm363, %v354, 0
      %367 = vmatprep.subr.mxu0 0.0
      %368 = vmatpush1.msra.mxu0 0.0
      %369 = vmatprep.subr.mxu0 0.0
      %370 = vmatpush1.msra.mxu0 0.0
      %371 = vmatprep.subr.mxu0 0.0
      %372 = vmatpush1.msra.mxu0 0.0
      %373 = vmatprep.subr.mxu0 0.0
      %374 = vmatpush1.msra.mxu0 0.0
      %375 = vmatprep.subr.mxu0 0.0
      %376 = vmatpush1.msra.mxu0 0.0
      %377 = vmatprep.subr.mxu0 0.0
      %378 = vmatpush1.msra.mxu0 0.0
      %379 = vmatprep.subr.mxu0 0.0
      %380 = vmatpush1.msra.mxu0 0.0
      %381 = vmatprep.subr.mxu0 0.0
      %382 = vmatpush1.msra.mxu0 0.0
      %383 = vmatprep.subr.mxu0 0.0
      %384 = vmatpush1.msra.mxu0 0.0
      %385 = vmatprep.subr.mxu0 0.0
      %386 = vmatpush1.msra.mxu0 0.0
      %387 = vmatprep.subr.mxu0 0.0
      %388 = vmatpush1.msra.mxu0 0.0
      %389 = vmatprep.subr.mxu0 0.0
      %390 = vmatpush1.msra.mxu0 0.0
      %391 = vmatprep.subr.mxu0 0.0
      %392 = vmatpush1.msra.mxu0 0.0
      %393 = vmatprep.subr.mxu0 0.0
      %394 = vmatpush1.msra.mxu0 0.0
      %395 = vmatprep.subr.mxu0 %v360
      %396 = vmatpush1.msra.mxu0 %v359
      %397 = vmatprep.subr.mxu0 %v356
      %398 = vmatpush1.msra.mxu0 %v355
      %399 = vmatprep.subr.mxu0 0.0
      %400 = vmatpush2.msra.mxu0 0.0
      %401 = vmatprep.subr.mxu0 0.0
      %402 = vmatpush2.msra.mxu0 0.0
      %403 = vmatprep.subr.mxu0 0.0
      %404 = vmatpush2.msra.mxu0 0.0
      %405 = vmatprep.subr.mxu0 0.0
      %406 = vmatpush2.msra.mxu0 0.0
      %407 = vmatprep.subr.mxu0 0.0
      %408 = vmatpush2.msra.mxu0 0.0
      %409 = vmatprep.subr.mxu0 0.0
      %410 = vmatpush2.msra.mxu0 0.0
      %411 = vmatprep.subr.mxu0 0.0
      %412 = vmatpush2.msra.mxu0 0.0
      %413 = vmatprep.subr.mxu0 0.0
      %414 = vmatpush2.msra.mxu0 0.0
      %415 = vmatprep.subr.mxu0 0.0
      %416 = vmatpush2.msra.mxu0 0.0
      %417 = vmatprep.subr.mxu0 0.0
      %418 = vmatpush2.msra.mxu0 0.0
      %419 = vmatprep.subr.mxu0 0.0
      %420 = vmatpush2.msra.mxu0 0.0
      %421 = vmatprep.subr.mxu0 0.0
      %422 = vmatpush2.msra.mxu0 0.0
      %423 = vmatprep.subr.mxu0 0.0
      %424 = vmatpush2.msra.mxu0 0.0
      %425 = vmatprep.subr.mxu0 0.0
      %426 = vmatpush2.msra.mxu0 0.0
      %427 = vmatprep.subr.mxu0 0.0
      %428 = vmatpush2.msra.mxu0 0.0
      %429 = vmatprep.subr.mxu0 0.0
      %430 = vmatpush2.msra.mxu0 0.0
      %431 = vmatprep.mubr.f32.mxu0 0.0
      %432 = vmatmul.mubr.f32.gmra.mxu0 %v365
      %v433 = vpop.f32.mrf.mxu0
      %v434 = vadd.f32 0.0, %v433
      %v435 = vpop.f32.mrf.mxu0
      %v436 = vadd.f32 0.0, %v435
      %437 = vdwg.mxu0
      %438 = vmatprep.subr.mxu0 0.0
      %439 = vmatpush1.msra.mxu0 0.0
      %440 = vmatprep.subr.mxu0 0.0
      %441 = vmatpush1.msra.mxu0 0.0
      %442 = vmatprep.subr.mxu0 0.0
      %443 = vmatpush1.msra.mxu0 0.0
      %444 = vmatprep.subr.mxu0 0.0
      %445 = vmatpush1.msra.mxu0 0.0
      %446 = vmatprep.subr.mxu0 0.0
      %447 = vmatpush1.msra.mxu0 0.0
      %448 = vmatprep.subr.mxu0 0.0
      %449 = vmatpush1.msra.mxu0 0.0
      %450 = vmatprep.subr.mxu0 0.0
      %451 = vmatpush1.msra.mxu0 0.0
      %452 = vmatprep.subr.mxu0 0.0
      %453 = vmatpush1.msra.mxu0 0.0
      %454 = vmatprep.subr.mxu0 0.0
      %455 = vmatpush1.msra.mxu0 0.0
      %456 = vmatprep.subr.mxu0 0.0
      %457 = vmatpush1.msra.mxu0 0.0
      %458 = vmatprep.subr.mxu0 0.0
      %459 = vmatpush1.msra.mxu0 0.0
      %460 = vmatprep.subr.mxu0 0.0
      %461 = vmatpush1.msra.mxu0 0.0
      %462 = vmatprep.subr.mxu0 0.0
      %463 = vmatpush1.msra.mxu0 0.0
      %464 = vmatprep.subr.mxu0 0.0
      %465 = vmatpush1.msra.mxu0 0.0
      %466 = vmatprep.subr.mxu0 %v362
      %467 = vmatpush1.msra.mxu0 %v361
      %468 = vmatprep.subr.mxu0 %v358
      %469 = vmatpush1.msra.mxu0 %v357
      %470 = vmatprep.subr.mxu0 0.0
      %471 = vmatpush2.msra.mxu0 0.0
      %472 = vmatprep.subr.mxu0 0.0
      %473 = vmatpush2.msra.mxu0 0.0
      %474 = vmatprep.subr.mxu0 0.0
      %475 = vmatpush2.msra.mxu0 0.0
      %476 = vmatprep.subr.mxu0 0.0
      %477 = vmatpush2.msra.mxu0 0.0
      %478 = vmatprep.subr.mxu0 0.0
      %479 = vmatpush2.msra.mxu0 0.0
      %480 = vmatprep.subr.mxu0 0.0
      %481 = vmatpush2.msra.mxu0 0.0
      %482 = vmatprep.subr.mxu0 0.0
      %483 = vmatpush2.msra.mxu0 0.0
      %484 = vmatprep.subr.mxu0 0.0
      %485 = vmatpush2.msra.mxu0 0.0
      %486 = vmatprep.subr.mxu0 0.0
      %487 = vmatpush2.msra.mxu0 0.0
      %488 = vmatprep.subr.mxu0 0.0
      %489 = vmatpush2.msra.mxu0 0.0
      %490 = vmatprep.subr.mxu0 0.0
      %491 = vmatpush2.msra.mxu0 0.0
      %492 = vmatprep.subr.mxu0 0.0
      %493 = vmatpush2.msra.mxu0 0.0
      %494 = vmatprep.subr.mxu0 0.0
      %495 = vmatpush2.msra.mxu0 0.0
      %496 = vmatprep.subr.mxu0 0.0
      %497 = vmatpush2.msra.mxu0 0.0
      %498 = vmatprep.subr.mxu0 0.0
      %499 = vmatpush2.msra.mxu0 0.0
      %500 = vmatprep.subr.mxu0 0.0
      %501 = vmatpush2.msra.mxu0 0.0
      %502 = vmatprep.mubr.f32.mxu0 0.0
      %503 = vmatmul.mubr.f32.gmra.mxu0 %v365
      %v504 = vpop.f32.mrf.mxu0
      %v505 = vadd.f32 0.0, %v504
      %v506 = vpop.f32.mrf.mxu0
      %v507 = vadd.f32 0.0, %v506
      %508 = vdwg.mxu0
      %509 = vmatprep.subr.mxu0 %v351
      %510 = vmatpush1.msra.mxu0 %v350
      %511 = vmatprep.subr.mxu0 %v347
      %512 = vmatpush1.msra.mxu0 %v346
      %513 = vmatprep.subr.mxu0 %v343
      %514 = vmatpush1.msra.mxu0 %v342
      %515 = vmatprep.subr.mxu0 %v339
      %516 = vmatpush1.msra.mxu0 %v338
      %517 = vmatprep.subr.mxu0 %v335
      %518 = vmatpush1.msra.mxu0 %v334
      %519 = vmatprep.subr.mxu0 %v331
      %520 = vmatpush1.msra.mxu0 %v330
      %521 = vmatprep.subr.mxu0 %v327
      %522 = vmatpush1.msra.mxu0 %v326
      %523 = vmatprep.subr.mxu0 %v323
      %524 = vmatpush1.msra.mxu0 %v322
      %525 = vmatprep.subr.mxu0 %v319
      %526 = vmatpush1.msra.mxu0 %v318
      %527 = vmatprep.subr.mxu0 %v315
      %528 = vmatpush1.msra.mxu0 %v314
      %529 = vmatprep.subr.mxu0 %v311
      %530 = vmatpush1.msra.mxu0 %v310
      %531 = vmatprep.subr.mxu0 %v307
      %532 = vmatpush1.msra.mxu0 %v306
      %533 = vmatprep.subr.mxu0 %v303
      %534 = vmatpush1.msra.mxu0 %v302
      %535 = vmatprep.subr.mxu0 %v299
      %536 = vmatpush1.msra.mxu0 %v298
      %537 = vmatprep.subr.mxu0 %v295
      %538 = vmatpush1.msra.mxu0 %v294
      %539 = vmatprep.subr.mxu0 %v291
      %540 = vmatpush1.msra.mxu0 %v290
      %541 = vmatprep.subr.mxu0 0.0
      %542 = vmatpush2.msra.mxu0 0.0
      %543 = vmatprep.subr.mxu0 0.0
      %544 = vmatpush2.msra.mxu0 0.0
      %545 = vmatprep.subr.mxu0 0.0
      %546 = vmatpush2.msra.mxu0 0.0
      %547 = vmatprep.subr.mxu0 0.0
      %548 = vmatpush2.msra.mxu0 0.0
      %549 = vmatprep.subr.mxu0 0.0
      %550 = vmatpush2.msra.mxu0 0.0
      %551 = vmatprep.subr.mxu0 0.0
      %552 = vmatpush2.msra.mxu0 0.0
      %553 = vmatprep.subr.mxu0 0.0
      %554 = vmatpush2.msra.mxu0 0.0
      %555 = vmatprep.subr.mxu0 0.0
      %556 = vmatpush2.msra.mxu0 0.0
      %557 = vmatprep.subr.mxu0 0.0
      %558 = vmatpush2.msra.mxu0 0.0
      %559 = vmatprep.subr.mxu0 0.0
      %560 = vmatpush2.msra.mxu0 0.0
      %561 = vmatprep.subr.mxu0 0.0
      %562 = vmatpush2.msra.mxu0 0.0
      %563 = vmatprep.subr.mxu0 0.0
      %564 = vmatpush2.msra.mxu0 0.0
      %565 = vmatprep.subr.mxu0 0.0
      %566 = vmatpush2.msra.mxu0 0.0
      %567 = vmatprep.subr.mxu0 0.0
      %568 = vmatpush2.msra.mxu0 0.0
      %569 = vmatprep.subr.mxu0 0.0
      %570 = vmatpush2.msra.mxu0 0.0
      %571 = vmatprep.subr.mxu0 0.0
      %572 = vmatpush2.msra.mxu0 0.0
      %573 = vmatprep.mubr.f32.mxu0 0.0
      %574 = vmatmul.mubr.f32.gmra.mxu0 %v289
      %v575 = vpop.f32.mrf.mxu0
      %v576 = vadd.f32 %v434, %v575
      %v577 = vpop.f32.mrf.mxu0
      %v578 = vadd.f32 %v436, %v577
      %579 = vdwg.mxu0
      %580 = vmatprep.subr.mxu0 %v353
      %581 = vmatpush1.msra.mxu0 %v352
      %582 = vmatprep.subr.mxu0 %v349
      %583 = vmatpush1.msra.mxu0 %v348
      %584 = vmatprep.subr.mxu0 %v345
      %585 = vmatpush1.msra.mxu0 %v344
      %586 = vmatprep.subr.mxu0 %v341
      %587 = vmatpush1.msra.mxu0 %v340
      %588 = vmatprep.subr.mxu0 %v337
      %589 = vmatpush1.msra.mxu0 %v336
      %590 = vmatprep.subr.mxu0 %v333
      %591 = vmatpush1.msra.mxu0 %v332
      %592 = vmatprep.subr.mxu0 %v329
      %593 = vmatpush1.msra.mxu0 %v328
      %594 = vmatprep.subr.mxu0 %v325
      %595 = vmatpush1.msra.mxu0 %v324
      %596 = vmatprep.subr.mxu0 %v321
      %597 = vmatpush1.msra.mxu0 %v320
      %598 = vmatprep.subr.mxu0 %v317
      %599 = vmatpush1.msra.mxu0 %v316
      %600 = vmatprep.subr.mxu0 %v313
      %601 = vmatpush1.msra.mxu0 %v312
      %602 = vmatprep.subr.mxu0 %v309
      %603 = vmatpush1.msra.mxu0 %v308
      %604 = vmatprep.subr.mxu0 %v305
      %605 = vmatpush1.msra.mxu0 %v304
      %606 = vmatprep.subr.mxu0 %v301
      %607 = vmatpush1.msra.mxu0 %v300
      %608 = vmatprep.subr.mxu0 %v297
      %609 = vmatpush1.msra.mxu0 %v296
      %610 = vmatprep.subr.mxu0 %v293
      %611 = vmatpush1.msra.mxu0 %v292
      %612 = vmatprep.subr.mxu0 0.0
      %613 = vmatpush2.msra.mxu0 0.0
      %614 = vmatprep.subr.mxu0 0.0
      %615 = vmatpush2.msra.mxu0 0.0
      %616 = vmatprep.subr.mxu0 0.0
      %617 = vmatpush2.msra.mxu0 0.0
      %618 = vmatprep.subr.mxu0 0.0
      %619 = vmatpush2.msra.mxu0 0.0
      %620 = vmatprep.subr.mxu0 0.0
      %621 = vmatpush2.msra.mxu0 0.0
      %622 = vmatprep.subr.mxu0 0.0
      %623 = vmatpush2.msra.mxu0 0.0
      %624 = vmatprep.subr.mxu0 0.0
      %625 = vmatpush2.msra.mxu0 0.0
      %626 = vmatprep.subr.mxu0 0.0
      %627 = vmatpush2.msra.mxu0 0.0
      %628 = vmatprep.subr.mxu0 0.0
      %629 = vmatpush2.msra.mxu0 0.0
      %630 = vmatprep.subr.mxu0 0.0
      %631 = vmatpush2.msra.mxu0 0.0
      %632 = vmatprep.subr.mxu0 0.0
      %633 = vmatpush2.msra.mxu0 0.0
      %634 = vmatprep.subr.mxu0 0.0
      %635 = vmatpush2.msra.mxu0 0.0
      %636 = vmatprep.subr.mxu0 0.0
      %637 = vmatpush2.msra.mxu0 0.0
      %638 = vmatprep.subr.mxu0 0.0
      %639 = vmatpush2.msra.mxu0 0.0
      %640 = vmatprep.subr.mxu0 0.0
      %641 = vmatpush2.msra.mxu0 0.0
      %642 = vmatprep.subr.mxu0 0.0
      %643 = vmatpush2.msra.mxu0 0.0
      %644 = vmatprep.mubr.f32.mxu0 0.0
      %645 = vmatmul.mubr.f32.gmra.mxu0 %v289
      %v646 = vpop.f32.mrf.mxu0
      %v647 = vadd.f32 %v505, %v646
      %v648 = vpop.f32.mrf.mxu0
      %v649 = vadd.f32 %v507, %v648
      %650 = vdwg.mxu0
      %v651 = vld [vmem:[%s4] sm:$0xf]
      %v653 = vlaneseq
      %v654 = vshrl.u32 %v653, 7
      %v655 = vsub.s32 0, %v654
      %v656 = vrot.slane %v651, %v655
      %v657 = vlaneseq
      %v658 = vshrl.u32 %v657, 7
      %v659 = vsub.s32 1, %v658
      %v660 = vrot.slane %v651, %v659
      %v661 = vlaneseq
      %v662 = vshrl.u32 %v661, 7
      %v663 = vsub.s32 2, %v662
      %v664 = vrot.slane %v651, %v663
      %v665 = vlaneseq
      %v666 = vshrl.u32 %v665, 7
      %v667 = vsub.s32 3, %v666
      %v668 = vrot.slane %v651, %v667
      %v673 = vadd.f32 %v576, %v656
      %v674 = vadd.f32 %v578, %v660
      %v675 = vadd.f32 %v647, %v664
      %v676 = vadd.f32 %v649, %v668
      %v677 = vmul.f32 %v673, 0.5
      %v678 = vmul.f32 %v674, 0.5
      %v679 = vmul.f32 %v675, 0.5
      %v680 = vmul.f32 %v676, 0.5
      %v681 = vmul.f32 %v673, 0.70710677
      %v682 = vmul.f32 %v674, 0.70710677
      %v683 = vmul.f32 %v675, 0.70710677
      %v684 = vmul.f32 %v676, 0.70710677
      %v685 = verf.f32.pop %v681
      %v686 = verf.f32.pop %v682
      %v687 = verf.f32.pop %v683
      %v688 = verf.f32.pop %v684
      %v689 = vadd.f32 %v685, 1.0
      %v690 = vadd.f32 %v686, 1.0
      %v691 = vadd.f32 %v687, 1.0
      %v692 = vadd.f32 %v688, 1.0
      %v693 = vmul.f32 %v677, %v689
      %v694 = vmul.f32 %v678, %v690
      %v695 = vmul.f32 %v679, %v691
      %v696 = vmul.f32 %v680, %v692
      %697 = vst [vmem:[%s288] sm:$0xff] %v693
      %698 = vst [vmem:[%s288 + $0x8] sm:$0xff] %v694
      %699 = vst [vmem:[%s288 + $0x10] sm:$0xff] %v695
      %700 = vst [vmem:[%s288 + $0x18] sm:$0xff] %v696
      %p701 = scmp.lt.s32.totalorder %s20, 1
      %s702 = scalar_select %p701, %s20, 1
      %p703 = scmp.lt.s32.totalorder %s21, 1
      %s704 = scalar_select %p703, %s21, 1
      %s705 = smul.addr %s704, 4
      %s706 = smul.addr %s702, 8
      %s707 = sadd.s32 %s705, %s706
      %s708 = smul.addr %s707, 8
      %s709 = scalar_lea.vmem %s5, %s708
      // Predicated region
      $region41: #{conv_embedding_pallas.1} parent=39 // pred_check
        %p710 = pneg %p167
      $region42: #{conv_embedding_pallas.1} parent=39 // pred_check_branch
        %712 = sbr.rel (%p710) target = $region44
      $region43: #{conv_embedding_pallas.1} parent=39 // pred_region
        _
      $region44: #{conv_embedding_pallas.1} parent=39 // pred_fallthru
        _
    $region40: #{conv_embedding_pallas.1} parent=5 // pred_fallthru
      _
    %p713 = scmp.le.s32.totalorder 2, %s11
    // Predicated region
    $region45: #{conv_embedding_pallas.1} parent=5 // pred_check
      %p714 = pneg %p713
    $region46: #{conv_embedding_pallas.1} parent=5 // pred_check_branch
      %716 = sbr.rel (%p714) target = $region48
    $region47: #{conv_embedding_pallas.1} parent=5 // pred_region
      %s717 = ssub.s32 %s11, 2
      // Predicated region
      $region49: #{conv_embedding_pallas.1} parent=47 // pred_check
        %p718 = pneg %p173
      $region50: #{conv_embedding_pallas.1} parent=47 // pred_check_branch
        %720 = sbr.rel (%p718) target = $region52
      $region51: #{conv_embedding_pallas.1} parent=47 // pred_region
        %p721 = scmp.lt.s32.totalorder %s22, 1
        %s722 = scalar_select %p721, %s22, 1
        %p723 = scmp.lt.s32.totalorder %s23, 1
        %s724 = scalar_select %p723, %s23, 1
        %s725 = smul.addr %s724, 4
        %s726 = smul.addr %s722, 8
        %s727 = sadd.s32 %s725, %s726
        %s728 = smul.addr %s727, 8
        %s729 = scalar_lea.vmem %s5, %s728
      $region52: #{conv_embedding_pallas.1} parent=47 // pred_fallthru
        _
    $region48: #{conv_embedding_pallas.1} parent=5 // pred_fallthru
      _
  $region6: #{conv_embedding_pallas.1} parent=0 // loop_footer
    %s15 = sadd.s32 1, %s11
  $region7: #{conv_embedding_pallas.1} parent=0 // loop_footer_branch
    %10 = sbr.rel target = $region3
  $region8: #{conv_embedding_pallas.1} parent=0 // loop_exit
    _

</llo_original>
